<compile_context>
chip_gen: v6e
topology: v6e:2x2x1
jax: 0.10.0
libtpu: 0.0.40
codegen_flags: <defaults>
</compile_context>

<pallas_src>
import jax
import jax.numpy as jnp
from jax.experimental import pallas as pl
from jax.experimental.pallas import tpu as pltpu


def _round_up(x, m):
    return (x + m - 1) // m * m


def _cdiv(a, b):
    return -(-a // b)


def _vmem_budgets():
    """Per-generation VMEM budgets: (max single input-block bytes, scoped vmem limit)."""
    try:
        cap = int(pltpu.get_tpu_info().vmem_capacity_bytes)
    except Exception:
        cap = 64 << 20  # conservative fallback = v7x per-TC physical VMEM
    # Leave >=25% of physical VMEM as headroom; never request more than 64 MiB.
    vmem_limit = min((cap * 3) // 4, 64 << 20)   # 48 MiB on v7x, 64 MiB on v5e/v6e
    # Double-buffered input must fit in ~half the limit; rest is out/acc/slack.
    max_block = min(vmem_limit // 4, 16 << 20)   # 12 MiB on v7x, 16 MiB on v5e/v6e
    return max_block, vmem_limit


def _make_gap_kernel(hw_total, hw_tile):
    """Global-average-pool kernel over a (rows, H*W) layout tiled along both axes."""
    inv_hw = 1.0 / float(hw_total)               # divisor is the FULL H*W
    last_valid = hw_total % hw_tile              # valid lanes in the last (partial) tile
    needs_mask = last_valid != 0

    def kernel(x_ref, o_ref, acc_ref):
        k = pl.program_id(1)
        last = pl.num_programs(1) - 1

        @pl.when(k == 0)
        def _init():
            acc_ref[...] = jnp.zeros_like(acc_ref)

        if needs_mask:
            # Steady state (all but the last k): plain unmasked sum, no VPU mask work.
            @pl.when(k < last)
            def _steady():
                acc_ref[...] += jnp.sum(
                    x_ref[...], axis=-1, keepdims=True, dtype=jnp.float32)

            # Last (partial) H*W tile only: zero the padded lanes, then sum.
            @pl.when(k == last)
            def _tail():
                x = x_ref[...]
                lane = jax.lax.broadcasted_iota(jnp.int32, x.shape, dimension=1)
                x = jnp.where(lane < last_valid, x, jnp.zeros_like(x))
                acc_ref[...] += jnp.sum(x, axis=-1, keepdims=True, dtype=jnp.float32)
        else:
            acc_ref[...] += jnp.sum(
                x_ref[...], axis=-1, keepdims=True, dtype=jnp.float32)

        @pl.when(k == last)
        def _finalize():
            o_ref[...] = (acc_ref[...] * inv_hw).astype(o_ref.dtype)

    return kernel


def _choose_tiles(nc, hw, itemsize, max_block_bytes, r_cap=2048, min_row_blocks=4):
    """Pick (r_tile, hw_tile): biggest TPU-tileable block under the VMEM budget."""
    # Sub-32-bit dtypes pack rows along sublanes: align row tiles to the native
    # packing (8 f32 / 16 bf16 / 32 int8-fp8 rows) so blocks land on whole tiles.
    packing = max(1, 4 // itemsize)
    r_align = 8 * packing

    r_min = nc if nc <= r_align else r_align  # full (small) row extent is always legal

    if r_min * hw * itemsize <= max_block_bytes:
        # The whole H*W extent fits in one block: single reduction step; tile rows.
        hw_tile = hw
        if nc <= r_align:
            r_tile = nc
        else:
            r_budget = max(1, max_block_bytes // (hw * itemsize))
            r_tile = max(r_align, (min(r_budget, r_cap) // r_align) * r_align)
            r_tile = min(r_tile, _round_up(nc, r_align))
            # Keep the row grid split into a few blocks: >=2 keeps both v7x
            # TensorCores streaming HBM, ~4 gives the software pipeline steps to
            # overlap DMA of block i+1 with the reduction of block i.
            target = max(r_align, _round_up(_cdiv(nc, min_row_blocks), r_align))
            r_tile = min(r_tile, target)
    else:
        # H*W too big for one block: tile the lane axis in multiples of 128.
        r_tile = r_min
        hw_tile = max(128, (max_block_bytes // (r_tile * itemsize)) // 128 * 128)
        hw_tile = min(hw_tile, _round_up(hw, 128))
    return r_tile, hw_tile


def global_avg_pool2d(x, *, r_tile=None, hw_tile=None,
                      min_pallas_bytes=256 * 1024, force_pallas=False):
    """Equivalent of torch.mean(x, dim=(2, 3)) for an NCHW tensor."""
    N, C, H, W = x.shape
    NC, HW = N * C, H * W
    itemsize = jnp.dtype(x.dtype).itemsize

    # Small-size fast path: pallas_call launch + pipeline prologue costs more than
    # the entire fused XLA reduction for tiny maps.
    if not force_pallas and NC * HW * itemsize < min_pallas_bytes:
        return jnp.mean(x, axis=(2, 3))

    x2 = x.reshape(NC, HW)  # NCHW is contiguous -> free reshape

    max_block_bytes, vmem_limit = _vmem_budgets()
    auto_r, auto_hw = _choose_tiles(NC, HW, itemsize, max_block_bytes)
    r_tile = auto_r if r_tile is None else r_tile
    hw_tile = auto_hw if hw_tile is None else hw_tile

    grid_r = pl.cdiv(NC, r_tile)
    grid_k = pl.cdiv(HW, hw_tile)
    nc_pad = grid_r * r_tile  # output rows incl. padding (sliced off below)

    # Advisory cost hint: cheap, bandwidth-bound reduction.
    cost = pl.CostEstimate(
        flops=NC * HW + NC,
        transcendentals=0,
        bytes_accessed=NC * HW * itemsize + NC * itemsize,
    )

    out = pl.pallas_call(
        _make_gap_kernel(HW, hw_tile),
        out_shape=jax.ShapeDtypeStruct((nc_pad, 1), x.dtype),
        grid_spec=pltpu.PrefetchScalarGridSpec(
            num_scalar_prefetch=0,
            grid=(grid_r, grid_k),
            in_specs=[pl.BlockSpec((r_tile, hw_tile), lambda r, k: (r, k))],
            out_specs=pl.BlockSpec((r_tile, 1), lambda r, k: (r, 0)),
            scratch_shapes=[pltpu.VMEM((r_tile, 1), jnp.float32)],
        ),
        compiler_params=pltpu.CompilerParams(
            dimension_semantics=("parallel", "arbitrary"),
            vmem_limit_bytes=vmem_limit,
        ),
        cost_estimate=cost,
    )(x2)

    return out[:NC, 0].reshape(N, C)


if __name__ == "__main__":
    key = jax.random.PRNGKey(0)

    # Primary test: small shape consistent with the module (N=2, C=4, 16x16).
    # force_pallas=True so the Pallas kernel itself is exercised even though the
    # fast path would normally handle a map this small.
    x = jax.random.normal(key, (2, 4, 16, 16), dtype=jnp.float32)
    out = jax.block_until_ready(global_avg_pool2d(x, force_pallas=True))
    ref = jnp.mean(x, axis=(2, 3))
    assert out.shape == (2, 4), out.shape
    assert jnp.allclose(out, ref, atol=1e-5, rtol=1e-5)

    k1, k2, k3, k4 = jax.random.split(key, 4)

    # Exercise the H*W reduction axis (grid_k > 1) and row tiling (grid_r > 1).
    x_big = jax.random.normal(k1, (2, 16, 32, 32), dtype=jnp.float32)
    out_big = jax.block_until_ready(
        global_avg_pool2d(x_big, force_pallas=True, r_tile=8, hw_tile=256))
    assert jnp.allclose(out_big, jnp.mean(x_big, axis=(2, 3)), atol=1e-5, rtol=1e-5)

    # Ragged case: N*C not a multiple of 8, H*W not a multiple of the tile
    # (exercises padded-row output slicing and the last-tile-only lane mask path).
    x_rag = jax.random.normal(k2, (3, 5, 20, 20), dtype=jnp.float32)
    out_rag = jax.block_until_ready(
        global_avg_pool2d(x_rag, force_pallas=True, r_tile=8, hw_tile=128))
    assert jnp.allclose(out_rag, jnp.mean(x_rag, axis=(2, 3)), atol=1e-5, rtol=1e-5)

    # bf16 input: native-width load, f32 accumulation, dtype-aware (16-row) tiling.
    x_bf16 = jax.random.normal(k3, (2, 8, 16, 16), dtype=jnp.bfloat16)
    out_bf16 = jax.block_until_ready(global_avg_pool2d(x_bf16, force_pallas=True))
    ref_bf16 = jnp.mean(x_bf16.astype(jnp.float32), axis=(2, 3))
    assert jnp.allclose(out_bf16.astype(jnp.float32), ref_bf16, atol=2e-2, rtol=2e-2)

    # Auto-tiling mid-size case: whole H*W fits one block, rows auto-split into
    # multiple "parallel" blocks (megacore / pipeline path).
    x_mid = jax.random.normal(k4, (4, 32, 64, 64), dtype=jnp.float32)
    out_mid = jax.block_until_ready(global_avg_pool2d(x_mid, force_pallas=True))
    assert jnp.allclose(out_mid, jnp.mean(x_mid, axis=(2, 3)), atol=1e-5, rtol=1e-5)

    # Fast path (no Pallas launch) still matches.
    assert jnp.allclose(global_avg_pool2d(x), ref, atol=1e-5, rtol=1e-5)

    print("KERNEL_OK")
</pallas_src>

<mosaic_0001>
module attributes {stable_mosaic.version = 11 : i64} {
  func.func @kernel(%arg0: i32, %arg1: i32, %arg2: memref<8x256xf32, #tpu.memory_space<vmem>>, %arg3: memref<8x1xf32, #tpu.memory_space<vmem>>, %arg4: memref<8x1xf32, #tpu.memory_space<vmem>>) attributes {dimension_semantics = [#tpu.dimension_semantics<parallel>, #tpu.dimension_semantics<arbitrary>], iteration_bounds = array<i64: 1, 1>, scalar_prefetch = 0 : i64, scratch_operands = 1 : i64, tpu.core_type = #tpu.core_type<tc>, window_params = [{transform_indices = @transform_0, window_bounds = array<i64: 8, 256>}, {transform_indices = @transform_1, window_bounds = array<i64: 8, 1>}]} {
    %c0_i32 = arith.constant 0 : i32
    %0 = arith.cmpi eq, %arg1, %c0_i32 : i32
    %1 = arith.extui %0 : i1 to i32
    %c0_i32_0 = arith.constant 0 : i32
    %2 = arith.cmpi ne, %1, %c0_i32_0 : i32
    scf.if %2 {
      %cst_8 = arith.constant 0.000000e+00 : f32
      %12 = vector.broadcast %cst_8 : f32 to vector<8x1xf32>
      %c0_9 = arith.constant 0 : index
      %c0_10 = arith.constant 0 : index
      %13 = vector.load %arg4[%c0_9, %c0_10] : memref<8x1xf32, #tpu.memory_space<vmem>>, vector<8x1xf32>
      tpu.vector_store %arg4[%c0_9, %c0_10], %12 {strides = array<i32>} : memref<8x1xf32, #tpu.memory_space<vmem>>, vector<8x1xf32>,
    } else {
    }
    %c0 = arith.constant 0 : index
    %c0_1 = arith.constant 0 : index
    %3 = vector.load %arg4[%c0, %c0_1] : memref<8x1xf32, #tpu.memory_space<vmem>>, vector<8x1xf32>
    %c0_2 = arith.constant 0 : index
    %c0_3 = arith.constant 0 : index
    %4 = vector.load %arg2[%c0_2, %c0_3] : memref<8x256xf32, #tpu.memory_space<vmem>>, vector<8x256xf32>
    %cst = arith.constant dense<0.000000e+00> : vector<8xf32>
    %5 = vector.multi_reduction <add>, %4, %cst [1] : vector<8x256xf32> to vector<8xf32>
    %6 = vector.shape_cast %5 : vector<8xf32> to vector<8x1xf32>
    %7 = arith.addf %3, %6 : vector<8x1xf32>
    %c0_4 = arith.constant 0 : index
    %c0_5 = arith.constant 0 : index
    %8 = vector.load %arg4[%c0_4, %c0_5] : memref<8x1xf32, #tpu.memory_space<vmem>>, vector<8x1xf32>
    tpu.vector_store %arg4[%c0_4, %c0_5], %7 {strides = array<i32>} : memref<8x1xf32, #tpu.memory_space<vmem>>, vector<8x1xf32>,
    %c0_i32_6 = arith.constant 0 : i32
    %9 = arith.cmpi eq, %arg1, %c0_i32_6 : i32
    %10 = arith.extui %9 : i1 to i32
    %c0_i32_7 = arith.constant 0 : i32
    %11 = arith.cmpi ne, %10, %c0_i32_7 : i32
    scf.if %11 {
      %c0_8 = arith.constant 0 : index
      %c0_9 = arith.constant 0 : index
      %12 = vector.load %arg4[%c0_8, %c0_9] : memref<8x1xf32, #tpu.memory_space<vmem>>, vector<8x1xf32>
      %cst_10 = arith.constant 3.906250e-03 : f32
      %13 = vector.broadcast %cst_10 : f32 to vector<8x1xf32>
      %14 = arith.mulf %12, %13 : vector<8x1xf32>
      %c0_11 = arith.constant 0 : index
      %c0_12 = arith.constant 0 : index
      %15 = vector.load %arg3[%c0_11, %c0_12] : memref<8x1xf32, #tpu.memory_space<vmem>>, vector<8x1xf32>
      tpu.vector_store %arg3[%c0_11, %c0_12], %14 {strides = array<i32>} : memref<8x1xf32, #tpu.memory_space<vmem>>, vector<8x1xf32>,
    } else {
    }
    return
  }
  func.func @transform_0(%arg0: i32, %arg1: i32) -> (i32, i32) {
    %c0_i32 = arith.constant 0 : i32
    return %arg0, %arg1 : i32, i32
  }
  func.func @transform_1(%arg0: i32, %arg1: i32) -> (i32, i32) {
    %c0_i32 = arith.constant 0 : i32
    %c0_i32_0 = arith.constant 0 : i32
    return %arg0, %c0_i32 : i32, i32
  }
}

</mosaic_0001>

<llo_original>
// kernel: tpu_custom_call.1
$region0: #{tpu_custom_call.1}
  #allocation0 [shape = 'u32[]', space=smem, size = 0x4, offset = 0x4, fixed_abs, tag = 'smem constant byte address 0x4 - core index']
  #allocation1 [shape = 'u32[144,128]{1,0:T(1,128)}', space=vmem, size = 0x12000, scoped, tag = 'internal scratch']
  #allocation2 [shape = 'f32[8,1]{1,0:T(8,128)}', space=vmem, size = 0x1000, scoped, tag = 'scratch operand']
  %s0 = inlined_call_operand.hbm [shape: f32[8,256], index: 0, kind: input, shape index: {}]
  %s1 = inlined_call_operand.vmem [shape: f32[8,1], index: 1, kind: output, shape index: {}]
  %s2 = sld [smem:[#allocation0]]
  $region26: #{tpu_custom_call.1} parent=0
    _
  %s4 = ssub.s32 1, %s2
  %s5 = scalar_select 0, %s4, %s2
  $region1: #{tpu_custom_call.1} parent=0
    #allocation3 [shape = 'u8[8192]{0}', space=vmem, size = 0x2000, scoped, tag = 'input window, operand 0, single buffered']
    #allocation4 [shape = 's32[1]{0}', space=sflag, size = 0x4, scoped, tag = 'scoped memory for tpu_custom_call.1']
    %6 = vsyncpa [#allocation4], 0
    // Predicated region
    $region2: #{tpu_custom_call.1} parent=1 // pred_check
      _
    $region3: #{tpu_custom_call.1} parent=1 // pred_check_branch
      %8 = sbr.rel (0) target = $region5
    $region4: #{tpu_custom_call.1} parent=1 // pred_region
      %s10 = ssub.s32 256, 256
      %11 = vsyncadd [#allocation4], %s10
      %s13 = sshll.u32 [#allocation3], 4
      %s14 = int_to_ptr.vmem [resolvable:$true] %s13
      %16 = dma.hbm_to_vmem [thread:$0]  %s0, 256, %s14, [#allocation4]
    $region5: #{tpu_custom_call.1} parent=1 // pred_fallthru
      _
    // Predicated region
    $region6: #{tpu_custom_call.1} parent=1 // pred_check
      _
    $region7: #{tpu_custom_call.1} parent=1 // pred_check_branch
      %18 = sbr.rel (0) target = $region9
    $region8: #{tpu_custom_call.1} parent=1 // pred_region
      %19 = dma.done [#allocation4], 256
    $region9: #{tpu_custom_call.1} parent=1 // pred_fallthru
      _
    %p20 = scmp.eq.s32.totalorder 0, 0
    // Predicated region
    $region10: #{tpu_custom_call.1} parent=1 // pred_check
      %p21 = pneg %p20
    $region11: #{tpu_custom_call.1} parent=1 // pred_check_branch
      %23 = sbr.rel (%p21) target = $region13
    $region12: #{tpu_custom_call.1} parent=1 // pred_region
      %vm24 = vcmask 7168
      %25 = vst.msk [vmem:[#allocation2] sm:$0xff] %vm24, 0.0
    $region13: #{tpu_custom_call.1} parent=1 // pred_fallthru
      _
    %v26 = vld [vmem:[#allocation2] sm:$0xff]
    %v27 = vld [vmem:[#allocation3] sm:$0xff]
    %v28 = vld [vmem:[#allocation3 + $0x8] sm:$0xff]
    %v29 = vadd.f32 %v27, %v28
    %30 = vadd.xlane.f32.xlu0 %v29
    %v31 = vpop.xlane.xlu0 %30
    %v32 = vadd.f32 %v26, %v31
    %vm33 = vcmask 7168
    %34 = vst.msk [vmem:[#allocation2] sm:$0xff] %vm33, %v32
    // Predicated region
    $region14: #{tpu_custom_call.1} parent=1 // pred_check
      %p35 = pneg %p20
    $region15: #{tpu_custom_call.1} parent=1 // pred_check_branch
      %37 = sbr.rel (%p35) target = $region17
    $region16: #{tpu_custom_call.1} parent=1 // pred_region
      %v38 = vld [vmem:[#allocation2] sm:$0xff]
      %v39 = vmul.f32 %v38, 0.00390625
      %40 = vst.msk [vmem:[%s1] sm:$0xff] %vm33, %v39
    $region17: #{tpu_custom_call.1} parent=1 // pred_fallthru
      _
    // Predicated region
    $region18: #{tpu_custom_call.1} parent=1 // pred_check
      _
    $region19: #{tpu_custom_call.1} parent=1 // pred_check_branch
      %42 = sbr.rel (0) target = $region21
    $region20: #{tpu_custom_call.1} parent=1 // pred_region
      _
    $region21: #{tpu_custom_call.1} parent=1 // pred_fallthru
      _
    // Predicated region
    $region22: #{tpu_custom_call.1} parent=1 // pred_check
      _
    $region23: #{tpu_custom_call.1} parent=1 // pred_check_branch
      %44 = sbr.rel (0) target = $region25
    $region24: #{tpu_custom_call.1} parent=1 // pred_region
      _
    $region25: #{tpu_custom_call.1} parent=1 // pred_fallthru
      _
    %45 = vsyncpa [#allocation4], 1

</llo_original>
